<compile_context>
chip_gen: v5e
topology: v5e:2x2
jax: 0.10.0
libtpu: 0.0.40
codegen_flags: <defaults>
</compile_context>

<pallas_src>
import jax
import jax.numpy as jnp
from jax import lax
from jax.experimental import pallas as pl
from jax.experimental.pallas import tpu as pltpu

HIDDEN = 32
INPUT_SIZE = 1


def rnn_kernel(x_ref, h0_ref, wih_ref, whh_ref, b_ref, wout_ref, bout_ref,
               out_ref, hn_ref, xw_ref):
    # x_ref:   (T, B)    time-major input (size-1 feature dim dropped)
    # h0_ref:  (B, H)    initial hidden state
    # wih_ref: (1, H)    W_ih^T (input_size == 1)
    # whh_ref: (H, H)    W_hh^T
    # b_ref:   (1, H)    b_ih + b_hh
    # wout_ref:(1, H)    output Linear weight (1, 32)
    # bout_ref:(1, 1)    output Linear bias (SMEM scalar)
    # out_ref: (B, T)    lane-dense outputs (every column equals Linear(h_T))
    # hn_ref:  (B, H)    final hidden state
    # xw_ref:  (T, B, H) VMEM scratch holding the hoisted input projection
    T = x_ref.shape[0]

    # ---- Hoisted out of the recurrence: input projection + bias for ALL steps.
    x_all = x_ref[...]                                           # (T, B)
    xw_ref[...] = (x_all[:, :, None] * wih_ref[...][None, :, :]
                   + b_ref[...][None, :, :])                     # (T, B, H)

    # Cast the recurrent weight to bf16 once; MXU runs bf16 x bf16 with f32 acc.
    whh_bf16 = whh_ref[...].astype(jnp.bfloat16)                 # (H, H)

    def step(t, h):
        rec = jnp.dot(h.astype(jnp.bfloat16), whh_bf16,
                      preferred_element_type=jnp.float32)        # (B, H) f32
        return jnp.tanh(xw_ref[t] + rec)

    # T is a static Python int -> fully unrolled, giving the scheduler visibility
    # across adjacent steps (MXU push/pop, EUP tanh, VPU add can co-issue).
    h_final = lax.fori_loop(0, T, step, h0_ref[...], unroll=True)
    hn_ref[...] = h_final

    # Linear(32 -> 1) applied to the LAST hidden state, replicated over T.
    y_last = (jnp.sum(h_final * wout_ref[...], axis=-1, keepdims=True)
              + bout_ref[0, 0])                                  # (B, 1)
    out_ref[...] = jnp.broadcast_to(y_last, out_ref.shape)       # (B, T) lane-dense


def rnn_forward(x, h_state, params):
    """x: (B, T, 1) float32 (batch_first). h_state: None or (1, B, 32)."""
    w_ih, w_hh, b_ih, b_hh, w_out, b_out = params
    B, T, _ = x.shape
    h0 = jnp.zeros((B, HIDDEN), jnp.float32) if h_state is None else h_state[0]

    x_tb = jnp.transpose(x[..., 0], (1, 0)).astype(jnp.float32)  # (T, B)
    wih_t = w_ih.T.astype(jnp.float32)                           # (1, H)
    whh_t = w_hh.T.astype(jnp.float32)                           # (H, H)
    b = (b_ih + b_hh)[None, :].astype(jnp.float32)               # (1, H)
    wout = w_out.astype(jnp.float32)                             # (1, H)
    bout = b_out.reshape(1, 1).astype(jnp.float32)               # (1, 1)

    vmem = pl.BlockSpec(memory_space=pltpu.MemorySpace.VMEM)
    smem = pl.BlockSpec(memory_space=pltpu.MemorySpace.SMEM)

    # Single grid step on purpose: the recurrence is serial in T and tiny, so a
    # grid over T would only add per-step pipeline overhead (~0.35 us each).
    # TODO(synk): if B grows, add a batch grid axis with dimension_semantics=("parallel",)
    # so v7x's two TensorCores each run an independent batch shard.
    out2d, h_n = pl.pallas_call(
        rnn_kernel,
        out_shape=(
            jax.ShapeDtypeStruct((B, T), jnp.float32),
            jax.ShapeDtypeStruct((B, HIDDEN), jnp.float32),
        ),
        in_specs=[vmem, vmem, vmem, vmem, vmem, vmem, smem],
        out_specs=(vmem, vmem),
        scratch_shapes=[pltpu.VMEM((T, B, HIDDEN), jnp.float32)],
    )(x_tb, h0, wih_t, whh_t, b, wout, bout)

    # Restore PyTorch-shaped outputs: (B, T, 1) and (1, B, 32).
    return out2d[..., None], h_n[None]


def ref_forward(x, h_state, params):
    """Pure-JAX f32 reference mirroring the PyTorch module exactly."""
    w_ih, w_hh, b_ih, b_hh, w_out, b_out = params
    B, T, _ = x.shape
    h = jnp.zeros((B, HIDDEN), jnp.float32) if h_state is None else h_state[0]
    for t in range(T):
        h = jnp.tanh(x[:, t, :] @ w_ih.T + b_ih + h @ w_hh.T + b_hh)
    y_last = h @ w_out.T + b_out                        # (B, 1)
    outs = jnp.broadcast_to(y_last[:, None, :], (B, T, 1))
    return outs, h[None]


def init_params(key):
    """Deterministic init mimicking PyTorch's U(-1/sqrt(H), 1/sqrt(H))."""
    ks = jax.random.split(key, 6)
    bound = 1.0 / jnp.sqrt(HIDDEN)
    w_ih = jax.random.uniform(ks[0], (HIDDEN, INPUT_SIZE), jnp.float32, -bound, bound)
    w_hh = jax.random.uniform(ks[1], (HIDDEN, HIDDEN), jnp.float32, -bound, bound)
    b_ih = jax.random.uniform(ks[2], (HIDDEN,), jnp.float32, -bound, bound)
    b_hh = jax.random.uniform(ks[3], (HIDDEN,), jnp.float32, -bound, bound)
    w_out = jax.random.uniform(ks[4], (1, HIDDEN), jnp.float32, -bound, bound)
    b_out = jax.random.uniform(ks[5], (1,), jnp.float32, -bound, bound)
    return (w_ih, w_hh, b_ih, b_hh, w_out, b_out)


if __name__ == "__main__":
    key = jax.random.PRNGKey(0)
    k_param, k_x = jax.random.split(key)
    params = init_params(k_param)

    B, T = 2, 8
    x = jax.random.normal(k_x, (B, T, INPUT_SIZE), jnp.float32)
    h_state = None   # matches the script-level `h_state = None`

    outs, h_n = rnn_forward(x, h_state, params)
    outs = jax.block_until_ready(outs)
    h_n = jax.block_until_ready(h_n)

    ref_outs, ref_h = ref_forward(x, h_state, params)
    assert outs.shape == (B, T, 1) and h_n.shape == (1, B, HIDDEN)
    # bf16 recurrent matmul vs. f32 reference -> looser tolerance (errors are ~1e-3
    # in practice; tanh-squashed state keeps the compounding bounded).
    assert jnp.allclose(outs, ref_outs, atol=2e-2, rtol=2e-2)
    assert jnp.allclose(h_n, ref_h, atol=2e-2, rtol=2e-2)

    print("KERNEL_OK")
</pallas_src>

<mosaic_0001>
module attributes {stable_mosaic.version = 11 : i64} {
  func.func @rnn_kernel(%arg0: memref<8x2xf32, #tpu.memory_space<vmem>>, %arg1: memref<2x32xf32, #tpu.memory_space<vmem>>, %arg2: memref<1x32xf32, #tpu.memory_space<vmem>>, %arg3: memref<32x32xf32, #tpu.memory_space<vmem>>, %arg4: memref<1x32xf32, #tpu.memory_space<vmem>>, %arg5: memref<1x32xf32, #tpu.memory_space<vmem>>, %arg6: memref<1x1xf32, #tpu.memory_space<smem>>, %arg7: memref<2x8xf32, #tpu.memory_space<vmem>>, %arg8: memref<2x32xf32, #tpu.memory_space<vmem>>, %arg9: memref<8x2x32xf32, #tpu.memory_space<vmem>>) attributes {dimension_semantics = [], scalar_prefetch = 0 : i64, scratch_operands = 1 : i64, tpu.core_type = #tpu.core_type<tc>} {
    %c0 = arith.constant 0 : index
    %c0_0 = arith.constant 0 : index
    %0 = vector.load %arg0[%c0, %c0_0] : memref<8x2xf32, #tpu.memory_space<vmem>>, vector<8x2xf32>
    %1 = vector.shape_cast %0 : vector<8x2xf32> to vector<8x2x1xf32>
    %c0_1 = arith.constant 0 : index
    %c0_2 = arith.constant 0 : index
    %2 = vector.load %arg2[%c0_1, %c0_2] : memref<1x32xf32, #tpu.memory_space<vmem>>, vector<1x32xf32>
    %3 = vector.shape_cast %2 : vector<1x32xf32> to vector<1x1x32xf32>
    %4 = vector.broadcast %1 : vector<8x2x1xf32> to vector<8x2x32xf32>
    %5 = vector.broadcast %3 : vector<1x1x32xf32> to vector<8x2x32xf32>
    %6 = arith.mulf %4, %5 : vector<8x2x32xf32>
    %c0_3 = arith.constant 0 : index
    %c0_4 = arith.constant 0 : index
    %7 = vector.load %arg4[%c0_3, %c0_4] : memref<1x32xf32, #tpu.memory_space<vmem>>, vector<1x32xf32>
    %8 = vector.shape_cast %7 : vector<1x32xf32> to vector<1x1x32xf32>
    %9 = vector.broadcast %8 : vector<1x1x32xf32> to vector<8x2x32xf32>
    %10 = arith.addf %6, %9 : vector<8x2x32xf32>
    %c0_5 = arith.constant 0 : index
    %c0_6 = arith.constant 0 : index
    %c0_7 = arith.constant 0 : index
    %11 = vector.load %arg9[%c0_5, %c0_6, %c0_7] : memref<8x2x32xf32, #tpu.memory_space<vmem>>, vector<8x2x32xf32>
    tpu.vector_store %arg9[%c0_5, %c0_6, %c0_7], %10 {strides = array<i32>} : memref<8x2x32xf32, #tpu.memory_space<vmem>>, vector<8x2x32xf32>,
    %c0_8 = arith.constant 0 : index
    %c0_9 = arith.constant 0 : index
    %12 = vector.load %arg3[%c0_8, %c0_9] : memref<32x32xf32, #tpu.memory_space<vmem>>, vector<32x32xf32>
    %13 = arith.truncf %12 : vector<32x32xf32> to vector<32x32xbf16>
    %c0_10 = arith.constant 0 : index
    %c0_11 = arith.constant 0 : index
    %14 = vector.load %arg1[%c0_10, %c0_11] : memref<2x32xf32, #tpu.memory_space<vmem>>, vector<2x32xf32>
    %c0_i32 = arith.constant 0 : i32
    %15 = arith.truncf %14 : vector<2x32xf32> to vector<2x32xbf16>
    %cst = arith.constant dense<0.000000e+00> : vector<2x32xf32>
    %16 = tpu.matmul %15, %13, %cst {dimension_numbers = #tpu.dot_dimension_numbers<[1], [0], [0], [1], [0, 0, 1, 1], [], []>} : vector<2x32xbf16>, vector<32x32xbf16>, vector<2x32xf32> -> vector<2x32xf32>
    %17 = arith.index_cast %c0_i32 : i32 to index
    %c0_12 = arith.constant 0 : index
    %c0_13 = arith.constant 0 : index
    %18 = vector.load %arg9[%17, %c0_12, %c0_13] : memref<8x2x32xf32, #tpu.memory_space<vmem>>, vector<1x2x32xf32>
    %19 = vector.shape_cast %18 : vector<1x2x32xf32> to vector<2x32xf32>
    %20 = arith.addf %19, %16 : vector<2x32xf32>
    %21 = math.tanh %20 : vector<2x32xf32>
    %c1_i32 = arith.constant 1 : i32
    %22 = arith.truncf %21 : vector<2x32xf32> to vector<2x32xbf16>
    %cst_14 = arith.constant dense<0.000000e+00> : vector<2x32xf32>
    %23 = tpu.matmul %22, %13, %cst_14 {dimension_numbers = #tpu.dot_dimension_numbers<[1], [0], [0], [1], [0, 0, 1, 1], [], []>} : vector<2x32xbf16>, vector<32x32xbf16>, vector<2x32xf32> -> vector<2x32xf32>
    %24 = arith.index_cast %c1_i32 : i32 to index
    %c0_15 = arith.constant 0 : index
    %c0_16 = arith.constant 0 : index
    %25 = vector.load %arg9[%24, %c0_15, %c0_16] : memref<8x2x32xf32, #tpu.memory_space<vmem>>, vector<1x2x32xf32>
    %26 = vector.shape_cast %25 : vector<1x2x32xf32> to vector<2x32xf32>
    %27 = arith.addf %26, %23 : vector<2x32xf32>
    %28 = math.tanh %27 : vector<2x32xf32>
    %c2_i32 = arith.constant 2 : i32
    %29 = arith.truncf %28 : vector<2x32xf32> to vector<2x32xbf16>
    %cst_17 = arith.constant dense<0.000000e+00> : vector<2x32xf32>
    %30 = tpu.matmul %29, %13, %cst_17 {dimension_numbers = #tpu.dot_dimension_numbers<[1], [0], [0], [1], [0, 0, 1, 1], [], []>} : vector<2x32xbf16>, vector<32x32xbf16>, vector<2x32xf32> -> vector<2x32xf32>
    %31 = arith.index_cast %c2_i32 : i32 to index
    %c0_18 = arith.constant 0 : index
    %c0_19 = arith.constant 0 : index
    %32 = vector.load %arg9[%31, %c0_18, %c0_19] : memref<8x2x32xf32, #tpu.memory_space<vmem>>, vector<1x2x32xf32>
    %33 = vector.shape_cast %32 : vector<1x2x32xf32> to vector<2x32xf32>
    %34 = arith.addf %33, %30 : vector<2x32xf32>
    %35 = math.tanh %34 : vector<2x32xf32>
    %c3_i32 = arith.constant 3 : i32
    %36 = arith.truncf %35 : vector<2x32xf32> to vector<2x32xbf16>
    %cst_20 = arith.constant dense<0.000000e+00> : vector<2x32xf32>
    %37 = tpu.matmul %36, %13, %cst_20 {dimension_numbers = #tpu.dot_dimension_numbers<[1], [0], [0], [1], [0, 0, 1, 1], [], []>} : vector<2x32xbf16>, vector<32x32xbf16>, vector<2x32xf32> -> vector<2x32xf32>
    %38 = arith.index_cast %c3_i32 : i32 to index
    %c0_21 = arith.constant 0 : index
    %c0_22 = arith.constant 0 : index
    %39 = vector.load %arg9[%38, %c0_21, %c0_22] : memref<8x2x32xf32, #tpu.memory_space<vmem>>, vector<1x2x32xf32>
    %40 = vector.shape_cast %39 : vector<1x2x32xf32> to vector<2x32xf32>
    %41 = arith.addf %40, %37 : vector<2x32xf32>
    %42 = math.tanh %41 : vector<2x32xf32>
    %c4_i32 = arith.constant 4 : i32
    %43 = arith.truncf %42 : vector<2x32xf32> to vector<2x32xbf16>
    %cst_23 = arith.constant dense<0.000000e+00> : vector<2x32xf32>
    %44 = tpu.matmul %43, %13, %cst_23 {dimension_numbers = #tpu.dot_dimension_numbers<[1], [0], [0], [1], [0, 0, 1, 1], [], []>} : vector<2x32xbf16>, vector<32x32xbf16>, vector<2x32xf32> -> vector<2x32xf32>
    %45 = arith.index_cast %c4_i32 : i32 to index
    %c0_24 = arith.constant 0 : index
    %c0_25 = arith.constant 0 : index
    %46 = vector.load %arg9[%45, %c0_24, %c0_25] : memref<8x2x32xf32, #tpu.memory_space<vmem>>, vector<1x2x32xf32>
    %47 = vector.shape_cast %46 : vector<1x2x32xf32> to vector<2x32xf32>
    %48 = arith.addf %47, %44 : vector<2x32xf32>
    %49 = math.tanh %48 : vector<2x32xf32>
    %c5_i32 = arith.constant 5 : i32
    %50 = arith.truncf %49 : vector<2x32xf32> to vector<2x32xbf16>
    %cst_26 = arith.constant dense<0.000000e+00> : vector<2x32xf32>
    %51 = tpu.matmul %50, %13, %cst_26 {dimension_numbers = #tpu.dot_dimension_numbers<[1], [0], [0], [1], [0, 0, 1, 1], [], []>} : vector<2x32xbf16>, vector<32x32xbf16>, vector<2x32xf32> -> vector<2x32xf32>
    %52 = arith.index_cast %c5_i32 : i32 to index
    %c0_27 = arith.constant 0 : index
    %c0_28 = arith.constant 0 : index
    %53 = vector.load %arg9[%52, %c0_27, %c0_28] : memref<8x2x32xf32, #tpu.memory_space<vmem>>, vector<1x2x32xf32>
    %54 = vector.shape_cast %53 : vector<1x2x32xf32> to vector<2x32xf32>
    %55 = arith.addf %54, %51 : vector<2x32xf32>
    %56 = math.tanh %55 : vector<2x32xf32>
    %c6_i32 = arith.constant 6 : i32
    %57 = arith.truncf %56 : vector<2x32xf32> to vector<2x32xbf16>
    %cst_29 = arith.constant dense<0.000000e+00> : vector<2x32xf32>
    %58 = tpu.matmul %57, %13, %cst_29 {dimension_numbers = #tpu.dot_dimension_numbers<[1], [0], [0], [1], [0, 0, 1, 1], [], []>} : vector<2x32xbf16>, vector<32x32xbf16>, vector<2x32xf32> -> vector<2x32xf32>
    %59 = arith.index_cast %c6_i32 : i32 to index
    %c0_30 = arith.constant 0 : index
    %c0_31 = arith.constant 0 : index
    %60 = vector.load %arg9[%59, %c0_30, %c0_31] : memref<8x2x32xf32, #tpu.memory_space<vmem>>, vector<1x2x32xf32>
    %61 = vector.shape_cast %60 : vector<1x2x32xf32> to vector<2x32xf32>
    %62 = arith.addf %61, %58 : vector<2x32xf32>
    %63 = math.tanh %62 : vector<2x32xf32>
    %c7_i32 = arith.constant 7 : i32
    %64 = arith.truncf %63 : vector<2x32xf32> to vector<2x32xbf16>
    %cst_32 = arith.constant dense<0.000000e+00> : vector<2x32xf32>
    %65 = tpu.matmul %64, %13, %cst_32 {dimension_numbers = #tpu.dot_dimension_numbers<[1], [0], [0], [1], [0, 0, 1, 1], [], []>} : vector<2x32xbf16>, vector<32x32xbf16>, vector<2x32xf32> -> vector<2x32xf32>
    %66 = arith.index_cast %c7_i32 : i32 to index
    %c0_33 = arith.constant 0 : index
    %c0_34 = arith.constant 0 : index
    %67 = vector.load %arg9[%66, %c0_33, %c0_34] : memref<8x2x32xf32, #tpu.memory_space<vmem>>, vector<1x2x32xf32>
    %68 = vector.shape_cast %67 : vector<1x2x32xf32> to vector<2x32xf32>
    %69 = arith.addf %68, %65 : vector<2x32xf32>
    %70 = math.tanh %69 : vector<2x32xf32>
    %c8_i32 = arith.constant 8 : i32
    %c0_35 = arith.constant 0 : index
    %c0_36 = arith.constant 0 : index
    %71 = vector.load %arg8[%c0_35, %c0_36] : memref<2x32xf32, #tpu.memory_space<vmem>>, vector<2x32xf32>
    tpu.vector_store %arg8[%c0_35, %c0_36], %70 {strides = array<i32>} : memref<2x32xf32, #tpu.memory_space<vmem>>, vector<2x32xf32>,
    %c0_37 = arith.constant 0 : index
    %c0_38 = arith.constant 0 : index
    %72 = vector.load %arg5[%c0_37, %c0_38] : memref<1x32xf32, #tpu.memory_space<vmem>>, vector<1x32xf32>
    %73 = vector.broadcast %72 : vector<1x32xf32> to vector<2x32xf32>
    %74 = arith.mulf %70, %73 : vector<2x32xf32>
    %cst_39 = arith.constant dense<0.000000e+00> : vector<2xf32>
    %75 = vector.multi_reduction <add>, %74, %cst_39 [1] : vector<2x32xf32> to vector<2xf32>
    %76 = vector.shape_cast %75 : vector<2xf32> to vector<2x1xf32>
    %c0_40 = arith.constant 0 : index
    %c0_41 = arith.constant 0 : index
    %77 = memref.load %arg6[%c0_40, %c0_41] : memref<1x1xf32, #tpu.memory_space<smem>>
    %78 = vector.broadcast %77 : f32 to vector<2x1xf32>
    %79 = arith.addf %76, %78 : vector<2x1xf32>
    %80 = vector.shape_cast %79 : vector<2x1xf32> to vector<2x1xf32>
    %81 = vector.broadcast %80 : vector<2x1xf32> to vector<2x8xf32>
    %c0_42 = arith.constant 0 : index
    %c0_43 = arith.constant 0 : index
    %82 = vector.load %arg7[%c0_42, %c0_43] : memref<2x8xf32, #tpu.memory_space<vmem>>, vector<2x8xf32>
    tpu.vector_store %arg7[%c0_42, %c0_43], %81 {strides = array<i32>} : memref<2x8xf32, #tpu.memory_space<vmem>>, vector<2x8xf32>,
    return
  }
}

</mosaic_0001>

<llo_original>
// kernel: tpu_custom_call.1
$region0: #{tpu_custom_call.1}
  #allocation0 [shape = 'u32[]', space=smem, size = 0x4, offset = 0x4, fixed_abs, tag = 'smem constant byte address 0x4 - core index']
  #allocation1 [shape = 'u32[72,128]{1,0:T(1,128)}', space=vmem, size = 0x9000, scoped, tag = 'internal scratch']
  #allocation2 [shape = 'f32[8,2,32]{2,1,0:T(2,128)}', space=vmem, size = 0x2000, scoped, tag = 'scratch operand']
  #allocation3 [shape = 'f32[1,1]{1,0:T(1,128)S(6)}', space=smem, size = 0x200, scoped, tag = 'scoped memory for tpu_custom_call.1']
  %s0 = inlined_call_operand.vmem [shape: f32[8,2], index: 0, kind: input, shape index: {}]
  %s1 = inlined_call_operand.vmem [shape: f32[2,32], index: 1, kind: input, shape index: {}]
  %s2 = inlined_call_operand.vmem [shape: f32[1,32], index: 2, kind: input, shape index: {}]
  %s3 = inlined_call_operand.hbm [shape: f32[32,32], index: 3, kind: input, shape index: {}]
  %s4 = inlined_call_operand.vmem [shape: f32[1,32], index: 4, kind: input, shape index: {}]
  %s5 = inlined_call_operand.vmem [shape: f32[1,32], index: 5, kind: input, shape index: {}]
  %s6 = inlined_call_operand.<no memory space> [shape: f32[1,1], index: 6, kind: input, shape index: {}]
  %s7 = inlined_call_operand.hbm [shape: f32[2,8], index: 7, kind: output, shape index: {0}]
  %s8 = inlined_call_operand.hbm [shape: f32[2,32], index: 8, kind: output, shape index: {1}]
  %9 = xla_tuple %s7, %s8
  %s10 = sld [smem:[#allocation0]]
  $region50: #{tpu_custom_call.1} parent=0
    _
  %s12 = ssub.s32 1, %s10
  %s13 = scalar_select 0, %s12, %s10
  %14 = sst [smem:[#allocation3]] %s6
  $region1: #{tpu_custom_call.1} parent=0
    #allocation4 [shape = 'u8[16384]{0}', space=vmem, size = 0x4000, scoped, tag = 'input window, operand 3, single buffered']
    #allocation5 [shape = 's32[1]{0}', space=sflag, size = 0x4, scoped, tag = 'scoped memory for tpu_custom_call.1']
    #allocation6 [shape = 's32[1]{0}', space=sflag, size = 0x4, scoped, tag = 'scoped memory for tpu_custom_call.1']
    #allocation7 [shape = 'u8[1024]{0}', space=vmem, size = 0x400, scoped, tag = 'output window, operand 0, single buffered']
    #allocation8 [shape = 'u8[1024]{0}', space=vmem, size = 0x400, scoped, tag = 'output window, operand 1, single buffered']
    #allocation9 [shape = 's32[1]{0}', space=sflag, size = 0x4, scoped, tag = 'scoped memory for tpu_custom_call.1']
    %15 = vsyncpa [#allocation5], 0
    %16 = vsyncpa [#allocation6], 0
    %17 = vsyncpa [#allocation9], 0
    // Predicated region
    $region2: #{tpu_custom_call.1} parent=1 // pred_check
      _
    $region3: #{tpu_custom_call.1} parent=1 // pred_check_branch
      %19 = sbr.rel (0) target = $region5
    $region4: #{tpu_custom_call.1} parent=1 // pred_region
      _
    $region5: #{tpu_custom_call.1} parent=1 // pred_fallthru
      _
    // Predicated region
    $region6: #{tpu_custom_call.1} parent=1 // pred_check
      _
    $region7: #{tpu_custom_call.1} parent=1 // pred_check_branch
      %21 = sbr.rel (0) target = $region9
    $region8: #{tpu_custom_call.1} parent=1 // pred_region
      _
    $region9: #{tpu_custom_call.1} parent=1 // pred_fallthru
      _
    // Predicated region
    $region10: #{tpu_custom_call.1} parent=1 // pred_check
      _
    $region11: #{tpu_custom_call.1} parent=1 // pred_check_branch
      %23 = sbr.rel (0) target = $region13
    $region12: #{tpu_custom_call.1} parent=1 // pred_region
      _
    $region13: #{tpu_custom_call.1} parent=1 // pred_fallthru
      _
    // Predicated region
    $region14: #{tpu_custom_call.1} parent=1 // pred_check
      _
    $region15: #{tpu_custom_call.1} parent=1 // pred_check_branch
      %25 = sbr.rel (0) target = $region17
    $region16: #{tpu_custom_call.1} parent=1 // pred_region
      %27 = vsyncadd [#allocation5], 0
      %s28 = sshll.u32 %s3, 4
      %s29 = int_to_ptr.hbm [resolvable:$true] %s28
      %s30 = sshll.u32 [#allocation4], 4
      %s31 = int_to_ptr.vmem [resolvable:$true] %s30
      %36 = dma.hbm_to_vmem [thread:$0]  %s29, 512, %s31, [#allocation5], 128, 128, 8
    $region17: #{tpu_custom_call.1} parent=1 // pred_fallthru
      _
    // Predicated region
    $region18: #{tpu_custom_call.1} parent=1 // pred_check
      _
    $region19: #{tpu_custom_call.1} parent=1 // pred_check_branch
      %38 = sbr.rel (0) target = $region21
    $region20: #{tpu_custom_call.1} parent=1 // pred_region
      _
    $region21: #{tpu_custom_call.1} parent=1 // pred_fallthru
      _
    // Predicated region
    $region22: #{tpu_custom_call.1} parent=1 // pred_check
      _
    $region23: #{tpu_custom_call.1} parent=1 // pred_check_branch
      %40 = sbr.rel (0) target = $region25
    $region24: #{tpu_custom_call.1} parent=1 // pred_region
      _
    $region25: #{tpu_custom_call.1} parent=1 // pred_fallthru
      _
    // Predicated region
    $region26: #{tpu_custom_call.1} parent=1 // pred_check
      _
    $region27: #{tpu_custom_call.1} parent=1 // pred_check_branch
      %42 = sbr.rel (0) target = $region29
    $region28: #{tpu_custom_call.1} parent=1 // pred_region
      _
    $region29: #{tpu_custom_call.1} parent=1 // pred_fallthru
      _
    // Predicated region
    $region30: #{tpu_custom_call.1} parent=1 // pred_check
      _
    $region31: #{tpu_custom_call.1} parent=1 // pred_check_branch
      %44 = sbr.rel (0) target = $region33
    $region32: #{tpu_custom_call.1} parent=1 // pred_region
      %46 = dma.done [#allocation5], 512
    $region33: #{tpu_custom_call.1} parent=1 // pred_fallthru
      _
    %v48 = vld [vmem:[%s0] sm:$0xff]
    %v49 = vperm.slane %v48, 0
    %v50 = vlaneseq
    %v51 = vshrl.u32 %v50, 7
    %53 = vset.pattern.permute.xlu0 %v51
    %54 = vperm.xlu0 %53, %v49
    %v55 = vpop.permute.xlu0 %54
    %v56 = vperm.slane %v48, 1
    %v57 = vlaneseq
    %v58 = vshrl.u32 %v57, 7
    %60 = vset.pattern.permute.xlu0 %v58
    %61 = vperm.xlu0 %60, %v56
    %v62 = vpop.permute.xlu0 %61
    %v63 = vperm.slane %v48, 2
    %v64 = vlaneseq
    %v65 = vshrl.u32 %v64, 7
    %67 = vset.pattern.permute.xlu0 %v65
    %68 = vperm.xlu0 %67, %v63
    %v69 = vpop.permute.xlu0 %68
    %v70 = vperm.slane %v48, 3
    %v71 = vlaneseq
    %v72 = vshrl.u32 %v71, 7
    %74 = vset.pattern.permute.xlu0 %v72
    %75 = vperm.xlu0 %74, %v70
    %v76 = vpop.permute.xlu0 %75
    %v77 = vperm.slane %v48, 4
    %v78 = vlaneseq
    %v79 = vshrl.u32 %v78, 7
    %81 = vset.pattern.permute.xlu0 %v79
    %82 = vperm.xlu0 %81, %v77
    %v83 = vpop.permute.xlu0 %82
    %v84 = vperm.slane %v48, 5
    %v85 = vlaneseq
    %v86 = vshrl.u32 %v85, 7
    %88 = vset.pattern.permute.xlu0 %v86
    %89 = vperm.xlu0 %88, %v84
    %v90 = vpop.permute.xlu0 %89
    %v91 = vperm.slane %v48, 6
    %v92 = vlaneseq
    %v93 = vshrl.u32 %v92, 7
    %95 = vset.pattern.permute.xlu0 %v93
    %96 = vperm.xlu0 %95, %v91
    %v97 = vpop.permute.xlu0 %96
    %v98 = vperm.slane %v48, 7
    %v99 = vlaneseq
    %v100 = vshrl.u32 %v99, 7
    %102 = vset.pattern.permute.xlu0 %v100
    %103 = vperm.xlu0 %102, %v98
    %v104 = vpop.permute.xlu0 %103
    %v105 = vld [vmem:[%s2] sm:$0x1]
    %v107 = vperm.slane %v105, 0
    %v109 = vmul.f32 %v55, %v107
    %v110 = vmul.f32 %v62, %v107
    %v111 = vmul.f32 %v69, %v107
    %v112 = vmul.f32 %v76, %v107
    %v113 = vmul.f32 %v83, %v107
    %v114 = vmul.f32 %v90, %v107
    %v115 = vmul.f32 %v97, %v107
    %v116 = vmul.f32 %v104, %v107
    %v117 = vld [vmem:[%s4] sm:$0x1]
    %v119 = vperm.slane %v117, 0
    %v121 = vadd.f32 %v109, %v119
    %v122 = vadd.f32 %v110, %v119
    %v123 = vadd.f32 %v111, %v119
    %v124 = vadd.f32 %v112, %v119
    %v125 = vadd.f32 %v113, %v119
    %v126 = vadd.f32 %v114, %v119
    %v127 = vadd.f32 %v115, %v119
    %v128 = vadd.f32 %v116, %v119
    %vm129 = vcmask 254976
    %130 = vst.msk [vmem:[#allocation2] sm:$0x3] %vm129, %v121
    %131 = vst.msk [vmem:[#allocation2 + $0x2] sm:$0x3] %vm129, %v122
    %132 = vst.msk [vmem:[#allocation2 + $0x4] sm:$0x3] %vm129, %v123
    %133 = vst.msk [vmem:[#allocation2 + $0x6] sm:$0x3] %vm129, %v124
    %134 = vst.msk [vmem:[#allocation2 + $0x8] sm:$0x3] %vm129, %v125
    %135 = vst.msk [vmem:[#allocation2 + $0xa] sm:$0x3] %vm129, %v126
    %136 = vst.msk [vmem:[#allocation2 + $0xc] sm:$0x3] %vm129, %v127
    %137 = vst.msk [vmem:[#allocation2 + $0xe] sm:$0x3] %vm129, %v128
    %v138 = vld [vmem:[#allocation4] sm:$0xff]
    %v139 = vld [vmem:[#allocation4 + $0x8] sm:$0xff]
    %v140 = vld [vmem:[#allocation4 + $0x10] sm:$0xff]
    %v141 = vld [vmem:[#allocation4 + $0x18] sm:$0xff]
    %v142 = vpack.c.bf16 %v139, %v138
    %v143 = vpack.c.bf16 %v141, %v140
    %v144 = vld [vmem:[%s1] sm:$0x3]
    %v145 = vpack.c.bf16 %v144, %v144
    %vm146 = vcmask 261120
    %v148 = vsel %vm146, %v145, 0
    %150 = vmatpush.bf16.msra.mxu0 0
    %151 = vmatpush.bf16.msra.mxu0 0
    %152 = vmatpush.bf16.msra.mxu0 0
    %153 = vmatpush.bf16.msra.mxu0 0
    %154 = vmatpush.bf16.msra.mxu0 0
    %155 = vmatpush.bf16.msra.mxu0 0
    %156 = vmatpush.bf16.msra.mxu0 %v143
    %157 = vmatpush.bf16.msra.mxu0 %v142
    %158 = vmatmul.bf16.gmra.mxu0 %v148
    %v159 = vpop.f32.mrf.mxu0
    %v160 = vadd.f32 0.0, %v159
    %v161 = vpop.f32.mrf.mxu0
    %162 = vdwg.mxu0
    %v163 = vld [vmem:[#allocation2] sm:$0x3]
    %v164 = vadd.f32 %v163, %v160
    %v165 = vtanh.pop %v164
    %v166 = vpack.c.bf16 %v165, %v165
    %v168 = vsel %vm146, %v166, 0
    %170 = vmatpush.bf16.msra.mxu0 0
    %171 = vmatpush.bf16.msra.mxu0 0
    %172 = vmatpush.bf16.msra.mxu0 0
    %173 = vmatpush.bf16.msra.mxu0 0
    %174 = vmatpush.bf16.msra.mxu0 0
    %175 = vmatpush.bf16.msra.mxu0 0
    %176 = vmatpush.bf16.msra.mxu0 %v143
    %177 = vmatpush.bf16.msra.mxu0 %v142
    %178 = vmatmul.bf16.gmra.mxu0 %v168
    %v179 = vpop.f32.mrf.mxu0
    %v180 = vadd.f32 0.0, %v179
    %v181 = vpop.f32.mrf.mxu0
    %182 = vdwg.mxu0
    %s183 = scalar_lea.vmem [#allocation2], 2
    %v184 = vld [vmem:[%s183] sm:$0x3]
    %v185 = vadd.f32 %v184, %v180
    %v186 = vtanh.pop %v185
    %v187 = vpack.c.bf16 %v186, %v186
    %v189 = vsel %vm146, %v187, 0
    %191 = vmatpush.bf16.msra.mxu0 0
    %192 = vmatpush.bf16.msra.mxu0 0
    %193 = vmatpush.bf16.msra.mxu0 0
    %194 = vmatpush.bf16.msra.mxu0 0
    %195 = vmatpush.bf16.msra.mxu0 0
    %196 = vmatpush.bf16.msra.mxu0 0
    %197 = vmatpush.bf16.msra.mxu0 %v143
    %198 = vmatpush.bf16.msra.mxu0 %v142
    %199 = vmatmul.bf16.gmra.mxu0 %v189
    %v200 = vpop.f32.mrf.mxu0
    %v201 = vadd.f32 0.0, %v200
    %v202 = vpop.f32.mrf.mxu0
    %203 = vdwg.mxu0
    %s204 = scalar_lea.vmem [#allocation2], 4
    %v205 = vld [vmem:[%s204] sm:$0x3]
    %v206 = vadd.f32 %v205, %v201
    %v207 = vtanh.pop %v206
    %v208 = vpack.c.bf16 %v207, %v207
    %v210 = vsel %vm146, %v208, 0
    %212 = vmatpush.bf16.msra.mxu0 0
    %213 = vmatpush.bf16.msra.mxu0 0
    %214 = vmatpush.bf16.msra.mxu0 0
    %215 = vmatpush.bf16.msra.mxu0 0
    %216 = vmatpush.bf16.msra.mxu0 0
    %217 = vmatpush.bf16.msra.mxu0 0
    %218 = vmatpush.bf16.msra.mxu0 %v143
    %219 = vmatpush.bf16.msra.mxu0 %v142
    %220 = vmatmul.bf16.gmra.mxu0 %v210
    %v221 = vpop.f32.mrf.mxu0
    %v222 = vadd.f32 0.0, %v221
    %v223 = vpop.f32.mrf.mxu0
    %224 = vdwg.mxu0
    %s225 = scalar_lea.vmem [#allocation2], 6
    %v226 = vld [vmem:[%s225] sm:$0x3]
    %v227 = vadd.f32 %v226, %v222
    %v228 = vtanh.pop %v227
    %v229 = vpack.c.bf16 %v228, %v228
    %v231 = vsel %vm146, %v229, 0
    %233 = vmatpush.bf16.msra.mxu0 0
    %234 = vmatpush.bf16.msra.mxu0 0
    %235 = vmatpush.bf16.msra.mxu0 0
    %236 = vmatpush.bf16.msra.mxu0 0
    %237 = vmatpush.bf16.msra.mxu0 0
    %238 = vmatpush.bf16.msra.mxu0 0
    %239 = vmatpush.bf16.msra.mxu0 %v143
    %240 = vmatpush.bf16.msra.mxu0 %v142
    %241 = vmatmul.bf16.gmra.mxu0 %v231
    %v242 = vpop.f32.mrf.mxu0
    %v243 = vadd.f32 0.0, %v242
    %v244 = vpop.f32.mrf.mxu0
    %245 = vdwg.mxu0
    %s246 = scalar_lea.vmem [#allocation2], 8
    %v247 = vld [vmem:[%s246] sm:$0x3]
    %v248 = vadd.f32 %v247, %v243
    %v249 = vtanh.pop %v248
    %v250 = vpack.c.bf16 %v249, %v249
    %v252 = vsel %vm146, %v250, 0
    %254 = vmatpush.bf16.msra.mxu0 0
    %255 = vmatpush.bf16.msra.mxu0 0
    %256 = vmatpush.bf16.msra.mxu0 0
    %257 = vmatpush.bf16.msra.mxu0 0
    %258 = vmatpush.bf16.msra.mxu0 0
    %259 = vmatpush.bf16.msra.mxu0 0
    %260 = vmatpush.bf16.msra.mxu0 %v143
    %261 = vmatpush.bf16.msra.mxu0 %v142
    %262 = vmatmul.bf16.gmra.mxu0 %v252
    %v263 = vpop.f32.mrf.mxu0
    %v264 = vadd.f32 0.0, %v263
    %v265 = vpop.f32.mrf.mxu0
    %266 = vdwg.mxu0
    %s267 = scalar_lea.vmem [#allocation2], 10
    %v268 = vld [vmem:[%s267] sm:$0x3]
    %v269 = vadd.f32 %v268, %v264
    %v270 = vtanh.pop %v269
    %v271 = vpack.c.bf16 %v270, %v270
    %v273 = vsel %vm146, %v271, 0
    %275 = vmatpush.bf16.msra.mxu0 0
    %276 = vmatpush.bf16.msra.mxu0 0
    %277 = vmatpush.bf16.msra.mxu0 0
    %278 = vmatpush.bf16.msra.mxu0 0
    %279 = vmatpush.bf16.msra.mxu0 0
    %280 = vmatpush.bf16.msra.mxu0 0
    %281 = vmatpush.bf16.msra.mxu0 %v143
    %282 = vmatpush.bf16.msra.mxu0 %v142
    %283 = vmatmul.bf16.gmra.mxu0 %v273
    %v284 = vpop.f32.mrf.mxu0
    %v285 = vadd.f32 0.0, %v284
    %v286 = vpop.f32.mrf.mxu0
    %287 = vdwg.mxu0
    %s288 = scalar_lea.vmem [#allocation2], 12
    %v289 = vld [vmem:[%s288] sm:$0x3]
    %v290 = vadd.f32 %v289, %v285
    %v291 = vtanh.pop %v290
    %v292 = vpack.c.bf16 %v291, %v291
    %v294 = vsel %vm146, %v292, 0
    %296 = vmatpush.bf16.msra.mxu0 0
    %297 = vmatpush.bf16.msra.mxu0 0
    %298 = vmatpush.bf16.msra.mxu0 0
    %299 = vmatpush.bf16.msra.mxu0 0
    %300 = vmatpush.bf16.msra.mxu0 0
    %301 = vmatpush.bf16.msra.mxu0 0
    %302 = vmatpush.bf16.msra.mxu0 %v143
    %303 = vmatpush.bf16.msra.mxu0 %v142
    %304 = vmatmul.bf16.gmra.mxu0 %v294
    %v305 = vpop.f32.mrf.mxu0
    %v306 = vadd.f32 0.0, %v305
    %v307 = vpop.f32.mrf.mxu0
    %308 = vdwg.mxu0
    %s309 = scalar_lea.vmem [#allocation2], 14
    %v310 = vld [vmem:[%s309] sm:$0x3]
    %v311 = vadd.f32 %v310, %v306
    %v312 = vtanh.pop %v311
    %313 = vst.msk [vmem:[#allocation8] sm:$0x3] %vm129, %v312
    %v314 = vld [vmem:[%s5] sm:$0x1]
    %v316 = vperm.slane %v314, 0
    %v318 = vmul.f32 %v312, %v316
    %v319 = vsel %vm129, %v318, 0.0
    %320 = vadd.xlane.f32.xlu0 %v319
    %v321 = vpop.xlane.xlu0 %320
    %s322 = sld [smem:[#allocation3]]
    %v323 = vstv %s322
    %v324 = vadd.f32 %v321, %v323
    %vm325 = vcmask 58368
    %326 = vst.msk [vmem:[#allocation7] sm:$0x3] %vm325, %v324
    // Predicated region
    $region34: #{tpu_custom_call.1} parent=1 // pred_check
      _
    $region35: #{tpu_custom_call.1} parent=1 // pred_check_branch
      %328 = sbr.rel (0) target = $region37
    $region36: #{tpu_custom_call.1} parent=1 // pred_region
      %330 = vsyncadd [#allocation6], 0
      %s332 = sshll.u32 [#allocation7], 4
      %s333 = int_to_ptr.vmem [resolvable:$true] %s332
      %s334 = sshll.u32 %s7, 4
      %s335 = int_to_ptr.hbm [resolvable:$true] %s334
      %337 = dma.vmem_to_hbm [thread:$0]  %s333, 32, %s335, [#allocation6]
    $region37: #{tpu_custom_call.1} parent=1 // pred_fallthru
      _
    // Predicated region
    $region38: #{tpu_custom_call.1} parent=1 // pred_check
      _
    $region39: #{tpu_custom_call.1} parent=1 // pred_check_branch
      %339 = sbr.rel (0) target = $region41
    $region40: #{tpu_custom_call.1} parent=1 // pred_region
      %341 = vsyncadd [#allocation9], 0
      %s343 = sshll.u32 [#allocation8], 4
      %s344 = int_to_ptr.vmem [resolvable:$true] %s343
      %s345 = sshll.u32 %s8, 4
      %s346 = int_to_ptr.hbm [resolvable:$true] %s345
      %348 = dma.vmem_to_hbm [thread:$0]  %s344, 32, %s346, [#allocation9]
    $region41: #{tpu_custom_call.1} parent=1 // pred_fallthru
      _
    // Predicated region
    $region42: #{tpu_custom_call.1} parent=1 // pred_check
      _
    $region43: #{tpu_custom_call.1} parent=1 // pred_check_branch
      %350 = sbr.rel (0) target = $region45
    $region44: #{tpu_custom_call.1} parent=1 // pred_region
      %352 = dma.done [#allocation6], 32
    $region45: #{tpu_custom_call.1} parent=1 // pred_fallthru
      _
    // Predicated region
    $region46: #{tpu_custom_call.1} parent=1 // pred_check
      _
    $region47: #{tpu_custom_call.1} parent=1 // pred_check_branch
      %354 = sbr.rel (0) target = $region49
    $region48: #{tpu_custom_call.1} parent=1 // pred_region
      %356 = dma.done [#allocation9], 32
    $region49: #{tpu_custom_call.1} parent=1 // pred_fallthru
      _
    %357 = vsyncpa [#allocation5], 1
    %358 = vsyncpa [#allocation6], 1
    %359 = vsyncpa [#allocation9], 1

</llo_original>
